<compile_context>
chip_gen: v7x
topology: tpu7x:2x2x1
jax: 0.10.0
libtpu: 0.0.40
codegen_flags: <defaults>
</compile_context>

<pallas_src>
import functools
import math

import numpy as np

import jax
import jax.numpy as jnp
from jax import lax
from jax.experimental import pallas as pl
from jax.experimental.pallas import tpu as pltpu

TILE_M = 512          # rows per block for the flat matmul path
TILE_N = 128          # lane-dense output tile (multiple of 128)
DEFORM_GROUPS = 8
VMEM_LIMIT_BYTES = 32 * 1024 * 1024   # explicit scoped-VMEM budget (all gens)


def _round_up(v, m):
    return ((v + m - 1) // m) * m


def _apply_act(y, act, alpha):
    if act == "lrelu":              # LeakyReLU (0.1 everywhere in this net)
        return jnp.where(y >= 0, y, alpha * y)
    if act == "relu":
        return jnp.maximum(y, 0.0)
    return y


# --------------------------------------------------------------------------
# Pallas kernel 1: flat matmul (im2col-free 1x1 convs, strided convs, DCN cols)
#   bf16 operands, f32 accumulation, fused bias + activation, lane-dense N.
# --------------------------------------------------------------------------
def _mm_bias_act_kernel(x_ref, w_ref, b_ref, o_ref, *, act, alpha):
    y = jnp.dot(x_ref[...], w_ref[...], preferred_element_type=jnp.float32)
    y = y + b_ref[...]
    o_ref[...] = _apply_act(y, act, alpha)


@functools.lru_cache(maxsize=None)
def _get_mm(m, k, n_pad, tile_m, act, alpha):
    kern = functools.partial(_mm_bias_act_kernel, act=act, alpha=alpha)
    call = pl.pallas_call(
        kern,
        out_shape=jax.ShapeDtypeStruct((m, n_pad), jnp.float32),
        grid_spec=pltpu.PrefetchScalarGridSpec(
            num_scalar_prefetch=0,
            grid=(pl.cdiv(m, tile_m), n_pad // TILE_N),
            in_specs=[
                pl.BlockSpec((tile_m, k), lambda i, j: (i, 0)),
                pl.BlockSpec((k, TILE_N), lambda i, j: (0, j)),
                pl.BlockSpec((1, TILE_N), lambda i, j: (0, j)),
            ],
            out_specs=pl.BlockSpec((tile_m, TILE_N), lambda i, j: (i, j)),
        ),
        compiler_params=pltpu.CompilerParams(
            dimension_semantics=("parallel", "parallel"),
            vmem_limit_bytes=VMEM_LIMIT_BYTES),
    )
    return jax.jit(call)


def matmul_bias_act(x, w, b, act="none", alpha=0.1):
    """(m,k) @ (k,n) + b, fused activation.  x/w cast to bf16, f32 accumulate."""
    m, k = x.shape
    n = w.shape[1]
    if act != "lrelu":
        alpha = 0.0
    n_pad = _round_up(n, TILE_N)
    tile_m = min(TILE_M, _round_up(m, 8))
    xb = x.astype(jnp.bfloat16)
    wb = w.astype(jnp.bfloat16)
    bb = b.astype(jnp.float32)
    if n_pad != n:
        wb = jnp.pad(wb, ((0, 0), (0, n_pad - n)))
        bb = jnp.pad(bb, (0, n_pad - n))
    out = _get_mm(m, k, n_pad, tile_m, act, float(alpha))(xb, wb, bb.reshape(1, n_pad))
    return out[:, :n]


# --------------------------------------------------------------------------
# Pallas kernel 2: fused direct conv (k x k, stride 1).  No im2col in HBM.
#   grid = (B, H_out, kh): the H-tap is a reduction grid axis picked by the
#   index_map; the kw column taps are reduced in-kernel from the row slab.
# --------------------------------------------------------------------------
def _dconv_kernel(x_ref, w_ref, b_ref, o_ref, acc_ref, *, kw, wo, act, alpha):
    t = pl.program_id(2)

    @pl.when(t == 0)
    def _():
        acc_ref[...] = jnp.zeros_like(acc_ref)

    xrow = x_ref[...]                       # (Wp, Cin) bf16 row slab
    acc = acc_ref[...]
    for dj in range(kw):                    # static column-tap loop
        acc = acc + jnp.dot(xrow[dj:dj + wo, :], w_ref[dj],
                            preferred_element_type=jnp.float32)
    acc_ref[...] = acc

    @pl.when(t == pl.num_programs(2) - 1)
    def _():
        y = acc_ref[...] + b_ref[...]
        o_ref[...] = _apply_act(y, act, alpha)


@functools.lru_cache(maxsize=None)
def _get_dconv(bsz, ho, wo, hp, wp, cin, kh, kw, n_pad, act, alpha):
    kern = functools.partial(_dconv_kernel, kw=kw, wo=wo, act=act, alpha=alpha)
    call = pl.pallas_call(
        kern,
        out_shape=jax.ShapeDtypeStruct((bsz, ho, wo, n_pad), jnp.float32),
        grid_spec=pltpu.PrefetchScalarGridSpec(
            num_scalar_prefetch=0,
            grid=(bsz, ho, kh),
            in_specs=[
                # one padded-image row per step; row tap selected via index_map
                pl.BlockSpec((None, None, wp, cin), lambda b, y, t: (b, y + t, 0, 0)),
                # per-row-tap weight slice (kw, Cin, N_pad)
                pl.BlockSpec((None, kw, cin, n_pad), lambda b, y, t: (t, 0, 0, 0)),
                pl.BlockSpec((1, n_pad), lambda b, y, t: (0, 0)),
            ],
            out_specs=pl.BlockSpec((None, None, wo, n_pad),
                                   lambda b, y, t: (b, y, 0, 0)),
            scratch_shapes=[pltpu.VMEM((wo, n_pad), jnp.float32)],
        ),
        compiler_params=pltpu.CompilerParams(
            dimension_semantics=("parallel", "parallel", "arbitrary"),
            vmem_limit_bytes=VMEM_LIMIT_BYTES),
    )
    return jax.jit(call)


def _direct_conv2d(x, w, b, padding, act, alpha):
    B, H, W, Cin = x.shape
    Cout, _, kh, kw = w.shape
    xb = x.astype(jnp.bfloat16)
    if padding:
        xb = jnp.pad(xb, ((0, 0), (padding, padding), (padding, padding), (0, 0)))
    Hp, Wp = H + 2 * padding, W + 2 * padding
    Ho, Wo = Hp - kh + 1, Wp - kw + 1
    n_pad = _round_up(Cout, TILE_N)
    wk = jnp.transpose(w, (2, 3, 1, 0)).astype(jnp.bfloat16)   # (kh, kw, Cin, Cout)
    bb = b.astype(jnp.float32)
    if n_pad != Cout:
        wk = jnp.pad(wk, ((0, 0), (0, 0), (0, 0), (0, n_pad - Cout)))
        bb = jnp.pad(bb, (0, n_pad - Cout))
    out = _get_dconv(B, Ho, Wo, Hp, Wp, Cin, kh, kw, n_pad, act, float(alpha))(
        xb, wk, bb.reshape(1, n_pad))
    return out[..., :Cout]


# --------------------------------------------------------------------------
# Conv2d dispatcher
# --------------------------------------------------------------------------
def conv2d(x, w, b, stride=1, padding=1, act="none", alpha=0.1):
    """x: (B,H,W,Cin) NHWC, w: torch layout (Cout,Cin,kh,kw)."""
    B, H, W, Cin = x.shape
    Cout, Cin_w, kh, kw = w.shape
    assert Cin == Cin_w, (Cin, Cin_w)
    if act != "lrelu":
        alpha = 0.0
    if stride == 1 and (kh > 1 or kw > 1):
        return _direct_conv2d(x, w, b, padding, act, alpha)

    # 1x1 convs (no patch blowup) and the two stride-2 convs: flat matmul path.
    xb = x.astype(jnp.bfloat16)
    if padding:
        xb = jnp.pad(xb, ((0, 0), (padding, padding), (padding, padding), (0, 0)))
    Ho = (H + 2 * padding - kh) // stride + 1
    Wo = (W + 2 * padding - kw) // stride + 1
    if kh == 1 and kw == 1 and stride == 1:
        p = xb.reshape(B * Ho * Wo, Cin)
    else:
        taps = []
        for i in range(kh):
            for j in range(kw):
                taps.append(xb[:, i:i + stride * (Ho - 1) + 1:stride,
                              j:j + stride * (Wo - 1) + 1:stride, :])
        p = jnp.stack(taps, axis=-1)                   # bf16 patches (halved bytes)
        p = p.reshape(B * Ho * Wo, Cin * kh * kw)      # channel-major, tap-minor
    wmat = w.reshape(Cout, -1).T
    out = matmul_bias_act(p, wmat, b, act, alpha)
    return out.reshape(B, Ho, Wo, Cout)


# --------------------------------------------------------------------------
# Plain-JAX glue ops (gather / resize / pooling)
# --------------------------------------------------------------------------
def lrelu(x, a=0.1):
    return jnp.where(x >= 0, x, a * x)


# TODO(synk): flow_warp / deformable sampling use JAX gathers; grid_sample has
# no clean Pallas TPU equivalent (data-dependent per-pixel gather).
def bilinear_sample(img, py, px, pad_mode):
    """img: (B,H,W,C); py,px: (B,...) pixel coords.  Returns (B,...,C)."""
    B, H, W, C = img.shape
    y0 = jnp.floor(py)
    x0 = jnp.floor(px)
    wy1 = py - y0
    wx1 = px - x0
    wy0 = 1.0 - wy1
    wx0 = 1.0 - wx1
    flat = img.reshape(B, H * W, C)
    out_shape = py.shape[1:]

    def gather(yi, xi):
        yc = jnp.clip(yi, 0, H - 1).astype(jnp.int32)
        xc = jnp.clip(xi, 0, W - 1).astype(jnp.int32)
        idx = (yc * W + xc).reshape(B, -1, 1)
        g = jnp.take_along_axis(flat, idx, axis=1).reshape((B,) + out_shape + (C,))
        if pad_mode == "zeros":
            valid = (yi >= 0) & (yi <= H - 1) & (xi >= 0) & (xi <= W - 1)
            g = g * valid[..., None].astype(img.dtype)
        return g

    return (gather(y0, x0) * (wy0 * wx0)[..., None]
            + gather(y0, x0 + 1.0) * (wy0 * wx1)[..., None]
            + gather(y0 + 1.0, x0) * (wy1 * wx0)[..., None]
            + gather(y0 + 1.0, x0 + 1.0) * (wy1 * wx1)[..., None])


def flow_warp(x, flow, pad_mode="zeros"):
    """x: (B,H,W,C), flow: (B,H,W,2) with (dx,dy); align_corners=True semantics."""
    B, H, W, C = x.shape
    gy, gx = jnp.meshgrid(jnp.arange(H, dtype=x.dtype),
                          jnp.arange(W, dtype=x.dtype), indexing="ij")
    px = gx[None] + flow[..., 0]
    py = gy[None] + flow[..., 1]
    return bilinear_sample(x, py, px, pad_mode)


def resize_bilinear(x, oh, ow, align_corners):
    B, H, W, C = x.shape
    if (oh, ow) == (H, W):
        return x
    if not align_corners:
        return jax.image.resize(x, (B, oh, ow, C), method="bilinear", antialias=False)
    ys = jnp.arange(oh, dtype=jnp.float32) * ((H - 1) / (oh - 1) if oh > 1 else 0.0)
    xs = jnp.arange(ow, dtype=jnp.float32) * ((W - 1) / (ow - 1) if ow > 1 else 0.0)
    py, px = jnp.meshgrid(ys, xs, indexing="ij")
    py = jnp.broadcast_to(py[None], (B, oh, ow))
    px = jnp.broadcast_to(px[None], (B, oh, ow))
    return bilinear_sample(x, py, px, "border")


def avg_pool_2x2(x):
    B, H, W, C = x.shape
    return x.reshape(B, H // 2, 2, W // 2, 2, C).mean(axis=(2, 4))


def max_pool_3x3_s2(x):
    init = jnp.array(-jnp.inf, x.dtype)
    return lax.reduce_window(x, init, lax.max, (1, 3, 3, 1), (1, 2, 2, 1),
                             [(0, 0), (1, 1), (1, 1), (0, 0)])


def avg_pool_3x3_s2(x):
    init = jnp.array(0.0, x.dtype)
    s = lax.reduce_window(x, init, lax.add, (1, 3, 3, 1), (1, 2, 2, 1),
                          [(0, 0), (1, 1), (1, 1), (0, 0)])
    return s / 9.0


def pixel_shuffle(x, r=2):
    B, H, W, C4 = x.shape
    C = C4 // (r * r)
    x = x.reshape(B, H, W, C, r, r)
    x = x.transpose(0, 1, 4, 2, 5, 3)
    return x.reshape(B, H * r, W * r, C)


# --------------------------------------------------------------------------
# Building blocks
# --------------------------------------------------------------------------
def residual_block(P, name, x):
    out = conv2d(x, P[name + ".conv1.w"], P[name + ".conv1.b"], act="relu")
    out = conv2d(out, P[name + ".conv2.w"], P[name + ".conv2.b"], act="none")
    return x + out


def conv_res_blocks(P, name, x, num_block):
    x = conv2d(x, P[name + ".conv0.w"], P[name + ".conv0.b"], act="lrelu")
    for k in range(num_block):
        x = residual_block(P, f"{name}.rb{k}", x)
    return x


# --------------------------------------------------------------------------
# SpyNet
# --------------------------------------------------------------------------
_SPY_MEAN = np.array([0.485, 0.456, 0.406], np.float32)
_SPY_STD = np.array([0.229, 0.224, 0.225], np.float32)


def spynet_basic_module(P, name, x):
    x = conv2d(x, P[name + ".c0.w"], P[name + ".c0.b"], padding=3, act="relu")
    x = conv2d(x, P[name + ".c1.w"], P[name + ".c1.b"], padding=3, act="relu")
    x = conv2d(x, P[name + ".c2.w"], P[name + ".c2.b"], padding=3, act="relu")
    x = conv2d(x, P[name + ".c3.w"], P[name + ".c3.b"], padding=3, act="relu")
    x = conv2d(x, P[name + ".c4.w"], P[name + ".c4.b"], padding=3, act="none")
    return x


def spynet_process(P, ref, supp):
    ref = (ref - _SPY_MEAN) / _SPY_STD
    supp = (supp - _SPY_MEAN) / _SPY_STD
    refs, supps = [ref], [supp]
    for _ in range(5):
        refs.insert(0, avg_pool_2x2(refs[0]))
        supps.insert(0, avg_pool_2x2(supps[0]))
    B, h0, w0, _ = refs[0].shape
    flow = jnp.zeros((B, h0 // 2, w0 // 2, 2), jnp.float32)
    for level in range(6):
        hL, wL = refs[level].shape[1:3]
        if flow.shape[1] == 0 or flow.shape[2] == 0:
            # coarsest level at small inputs: upsampled zero flow is still zero
            up = jnp.zeros((B, hL, wL, 2), jnp.float32)
        else:
            up = resize_bilinear(flow, flow.shape[1] * 2, flow.shape[2] * 2, True) * 2.0
            if up.shape[1] != hL:   # replicate-pad one row/col (avoids edge-pad on
                up = jnp.concatenate([up, up[:, -1:]], axis=1)        # empty axes)
            if up.shape[2] != wL:
                up = jnp.concatenate([up, up[:, :, -1:]], axis=2)
        warped = flow_warp(supps[level], up, pad_mode="border")
        inp = jnp.concatenate([refs[level], warped, up], axis=-1)
        flow = spynet_basic_module(P, f"spynet.bm{level}", inp) + up
    return flow


def spynet_flow(P, ref, supp):
    B, h, w, _ = ref.shape
    wf = int(math.floor(math.ceil(w / 32.0) * 32.0))
    hf = int(math.floor(math.ceil(h / 32.0) * 32.0))
    ref_r = resize_bilinear(ref, hf, wf, False)
    supp_r = resize_bilinear(supp, hf, wf, False)
    flow = spynet_process(P, ref_r, supp_r)
    flow = resize_bilinear(flow, h, w, False)
    flow = flow * jnp.array([w / wf, h / hf], jnp.float32)
    return flow


# --------------------------------------------------------------------------
# Modulated deformable conv (DCNv2Pack) — sampling in JAX, matmul in Pallas
# --------------------------------------------------------------------------
def dcn_v2(x, offset, mask, w, b):
    # offset layout follows DCNv2Pack cat(o1, o2): first dg*9 = y, next dg*9 = x.
    B, H, W, Cin = x.shape
    Cout = w.shape[0]
    dg = DEFORM_GROUPS
    cpg = Cin // dg
    oy = offset[..., :dg * 9].reshape(B, H, W, dg, 9)
    ox = offset[..., dg * 9:].reshape(B, H, W, dg, 9)
    m = mask.reshape(B, H, W, dg, 9)
    gy, gx = jnp.meshgrid(jnp.arange(H, dtype=jnp.float32),
                          jnp.arange(W, dtype=jnp.float32), indexing="ij")
    ky = jnp.array([t // 3 - 1 for t in range(9)], jnp.float32)
    kx = jnp.array([t % 3 - 1 for t in range(9)], jnp.float32)
    py = gy[None, :, :, None, None] + ky[None, None, None, None, :] + oy   # (B,H,W,dg,9)
    px = gx[None, :, :, None, None] + kx[None, None, None, None, :] + ox

    # Fold the deformable groups into the batch so ALL groups are sampled with
    # a single bilinear gather (4 gathers total instead of 4 * dg).
    xg = x.reshape(B, H, W, dg, cpg).transpose(0, 3, 1, 2, 4).reshape(B * dg, H, W, cpg)
    pyg = py.transpose(0, 3, 1, 2, 4).reshape(B * dg, H, W, 9)
    pxg = px.transpose(0, 3, 1, 2, 4).reshape(B * dg, H, W, 9)
    mg = m.transpose(0, 3, 1, 2, 4).reshape(B * dg, H, W, 9)
    sg = bilinear_sample(xg, pyg, pxg, "zeros")                 # (B*dg,H,W,9,cpg)
    sg = sg * mg[..., None]
    sg = sg.reshape(B, dg, H, W, 9, cpg).transpose(0, 2, 3, 1, 5, 4)   # (B,H,W,dg,cpg,9)
    col = sg.reshape(B * H * W, Cin * 9)
    out = matmul_bias_act(col, w.reshape(Cout, -1).T, b, "none")
    return out.reshape(B, H, W, Cout)


def dcn_pack(P, name, x, feat):
    out = conv2d(feat, P[name + ".conv_offset.w"], P[name + ".conv_offset.b"], act="none")
    c = DEFORM_GROUPS * 9
    o1, o2, mask = out[..., :c], out[..., c:2 * c], out[..., 2 * c:]
    offset = jnp.concatenate([o1, o2], axis=-1)
    mask = jax.nn.sigmoid(mask)
    return dcn_v2(x, offset, mask, P[name + ".w"], P[name + ".b"])


# --------------------------------------------------------------------------
# PCD alignment + TSA fusion + EDVR feature extractor
# --------------------------------------------------------------------------
def pcd_align(P, nbr, ref):
    up_offset = None
    up_feat = None
    feat = None
    for i in (3, 2, 1):
        L = f"l{i}"
        offset = jnp.concatenate([nbr[i - 1], ref[i - 1]], axis=-1)
        offset = conv2d(offset, P[f"pcd.offset_conv1.{L}.w"],
                        P[f"pcd.offset_conv1.{L}.b"], act="lrelu")
        if i == 3:
            offset = conv2d(offset, P[f"pcd.offset_conv2.{L}.w"],
                            P[f"pcd.offset_conv2.{L}.b"], act="lrelu")
        else:
            offset = conv2d(jnp.concatenate([offset, up_offset], axis=-1),
                            P[f"pcd.offset_conv2.{L}.w"],
                            P[f"pcd.offset_conv2.{L}.b"], act="lrelu")
            offset = conv2d(offset, P[f"pcd.offset_conv3.{L}.w"],
                            P[f"pcd.offset_conv3.{L}.b"], act="lrelu")
        feat = dcn_pack(P, f"pcd.dcn.{L}", nbr[i - 1], offset)
        if i < 3:
            feat = conv2d(jnp.concatenate([feat, up_feat], axis=-1),
                          P[f"pcd.feat_conv.{L}.w"], P[f"pcd.feat_conv.{L}.b"], act="none")
        if i > 1:
            feat = lrelu(feat)
            up_offset = resize_bilinear(offset, offset.shape[1] * 2, offset.shape[2] * 2, False) * 2.0
            up_feat = resize_bilinear(feat, feat.shape[1] * 2, feat.shape[2] * 2, False)
    offset = jnp.concatenate([feat, ref[0]], axis=-1)
    offset = conv2d(offset, P["pcd.cas_offset_conv1.w"], P["pcd.cas_offset_conv1.b"], act="lrelu")
    offset = conv2d(offset, P["pcd.cas_offset_conv2.w"], P["pcd.cas_offset_conv2.b"], act="lrelu")
    feat = lrelu(dcn_pack(P, "pcd.cas_dcn", feat, offset))
    return feat


def tsa_fusion(P, aligned, center):
    b, t, h, w, c = aligned.shape
    emb_ref = conv2d(aligned[:, center], P["tsa.temporal_attn1.w"], P["tsa.temporal_attn1.b"])
    emb = conv2d(aligned.reshape(b * t, h, w, c),
                 P["tsa.temporal_attn2.w"], P["tsa.temporal_attn2.b"]).reshape(b, t, h, w, -1)
    corr_prob = jax.nn.sigmoid(jnp.sum(emb * emb_ref[:, None], axis=-1))         # (b,t,h,w)
    aligned = aligned * corr_prob[..., None]
    aligned_flat = aligned.transpose(0, 2, 3, 1, 4).reshape(b, h, w, t * c)      # torch (t*c) order

    # feat_fusion and spatial_attn1 read the SAME input: fuse into one wider-N
    # 1x1 conv so the patch DMA is amortized and the MXU N dim is fuller.
    nf = P["tsa.feat_fusion.w"].shape[0]
    w_cat = jnp.concatenate([P["tsa.feat_fusion.w"], P["tsa.spatial_attn1.w"]], axis=0)
    b_cat = jnp.concatenate([P["tsa.feat_fusion.b"], P["tsa.spatial_attn1.b"]], axis=0)
    both = conv2d(aligned_flat, w_cat, b_cat, padding=0, act="lrelu")
    feat = both[..., :nf]
    attn = both[..., nf:]

    attn_max = max_pool_3x3_s2(attn)
    attn_avg = avg_pool_3x3_s2(attn)
    attn = conv2d(jnp.concatenate([attn_max, attn_avg], -1),
                  P["tsa.spatial_attn2.w"], P["tsa.spatial_attn2.b"], padding=0, act="lrelu")
    attn_level = conv2d(attn, P["tsa.spatial_attn_l1.w"], P["tsa.spatial_attn_l1.b"],
                        padding=0, act="lrelu")
    attn_max = max_pool_3x3_s2(attn_level)
    attn_avg = avg_pool_3x3_s2(attn_level)
    attn_level = conv2d(jnp.concatenate([attn_max, attn_avg], -1),
                        P["tsa.spatial_attn_l2.w"], P["tsa.spatial_attn_l2.b"], act="lrelu")
    attn_level = conv2d(attn_level, P["tsa.spatial_attn_l3.w"], P["tsa.spatial_attn_l3.b"],
                        act="lrelu")
    attn_level = resize_bilinear(attn_level, attn_level.shape[1] * 2, attn_level.shape[2] * 2, False)
    attn = conv2d(attn, P["tsa.spatial_attn3.w"], P["tsa.spatial_attn3.b"], act="lrelu") + attn_level
    attn = conv2d(attn, P["tsa.spatial_attn4.w"], P["tsa.spatial_attn4.b"], padding=0, act="lrelu")
    attn = resize_bilinear(attn, attn.shape[1] * 2, attn.shape[2] * 2, False)
    attn = conv2d(attn, P["tsa.spatial_attn5.w"], P["tsa.spatial_attn5.b"], act="none")
    attn_add = conv2d(conv2d(attn, P["tsa.spatial_attn_add1.w"], P["tsa.spatial_attn_add1.b"],
                             padding=0, act="lrelu"),
                      P["tsa.spatial_attn_add2.w"], P["tsa.spatial_attn_add2.b"],
                      padding=0, act="none")
    attn = jax.nn.sigmoid(attn)
    return feat * attn * 2 + attn_add


def edvr_forward(P, x):
    """x: (b, n, h, w, 3).  PCD alignment is batched over all n frames."""
    b, n, h, w, c = x.shape
    xf = x.reshape(b * n, h, w, c)
    feat_l1 = conv2d(xf, P["edvr.conv_first.w"], P["edvr.conv_first.b"], act="lrelu")
    for k in range(5):
        feat_l1 = residual_block(P, f"edvr.fe{k}", feat_l1)
    feat_l2 = conv2d(feat_l1, P["edvr.conv_l2_1.w"], P["edvr.conv_l2_1.b"], stride=2, act="lrelu")
    feat_l2 = conv2d(feat_l2, P["edvr.conv_l2_2.w"], P["edvr.conv_l2_2.b"], act="lrelu")
    feat_l3 = conv2d(feat_l2, P["edvr.conv_l3_1.w"], P["edvr.conv_l3_1.b"], stride=2, act="lrelu")
    feat_l3 = conv2d(feat_l3, P["edvr.conv_l3_2.w"], P["edvr.conv_l3_2.b"], act="lrelu")

    center = n // 2

    def rep_center(f):
        bn, H, W, C = f.shape
        fc = f.reshape(b, n, H, W, C)[:, center]
        return jnp.broadcast_to(fc[:, None], (b, n, H, W, C)).reshape(b * n, H, W, C)

    nbr = [feat_l1, feat_l2, feat_l3]
    ref = [rep_center(feat_l1), rep_center(feat_l2), rep_center(feat_l3)]
    aligned = pcd_align(P, nbr, ref)                    # batched over all frames
    aligned = aligned.reshape(b, n, h, w, -1)
    return tsa_fusion(P, aligned, center)


# --------------------------------------------------------------------------
# CIconVSR forward
# --------------------------------------------------------------------------
def pad_spatial(x):
    b, n, h, w, c = x.shape
    ph = (4 - h % 4) % 4
    pw = (4 - w % 4) % 4
    if ph or pw:
        x = jnp.pad(x, ((0, 0), (0, 0), (0, ph), (0, pw), (0, 0)), mode="reflect")
    return x


def ciconvsr_forward(P, x_nchw, num_feat=64, num_block=2, keyframe_stride=5,
                     temporal_padding=2):
    b, n, _, h_in, w_in = x_nchw.shape
    x = jnp.transpose(x_nchw, (0, 1, 3, 4, 2)).astype(jnp.float32)  # -> NHWC internally
    x = pad_spatial(x)
    h, w = x.shape[2], x.shape[3]

    keyframe_idx = list(range(0, n, keyframe_stride))
    if keyframe_idx[-1] != n - 1:
        keyframe_idx.append(n - 1)

    # ----- optical flow (SpyNet) -----
    x1 = x[:, :-1].reshape(b * (n - 1), h, w, 3)
    x2 = x[:, 1:].reshape(b * (n - 1), h, w, 3)
    flows_backward = spynet_flow(P, x1, x2).reshape(b, n - 1, h, w, 2)
    flows_forward = spynet_flow(P, x2, x1).reshape(b, n - 1, h, w, 2)

    # ----- keyframe features (EDVR), all keyframes batched through one call ---
    assert temporal_padding == 2
    x_pad_t = jnp.concatenate(
        [x[:, jnp.array([4, 3])], x, x[:, jnp.array([n - 4, n - 5])]], axis=1)
    num_frames = 2 * temporal_padding + 1
    windows = jnp.concatenate(
        [x_pad_t[:, i:i + num_frames] for i in keyframe_idx], axis=0)  # (nkf*b, nf, h, w, 3)
    feats_all = edvr_forward(P, windows)
    feats_keyframe = {idx: feats_all[j * b:(j + 1) * b]
                      for j, idx in enumerate(keyframe_idx)}

    # ----- backward branch -----
    # TODO(synk): the per-frame recurrences below stay as Python loops (state
    # carried across frames); a lax.scan version would need the whole forward
    # jitted with static keyframe masks.
    out_l = []
    feat_prop = jnp.zeros((b, h, w, num_feat), jnp.float32)
    for i in range(n - 1, -1, -1):
        x_i = x[:, i]
        if i < n - 1:
            feat_prop = flow_warp(feat_prop, flows_backward[:, i], pad_mode="zeros")
        if i in keyframe_idx:
            feat_prop = conv2d(jnp.concatenate([feat_prop, feats_keyframe[i]], -1),
                               P["backward_fusion.w"], P["backward_fusion.b"])
        feat_prop = conv_res_blocks(P, "backward_trunk",
                                    jnp.concatenate([x_i, feat_prop], -1), num_block)
        out_l.insert(0, feat_prop)

    # ----- forward branch + reconstruction -----
    feat_prop = jnp.zeros_like(feat_prop)
    for i in range(n):
        x_i = x[:, i]
        if i > 0:
            feat_prop = flow_warp(feat_prop, flows_forward[:, i - 1], pad_mode="zeros")
        if i in keyframe_idx:
            feat_prop = conv2d(jnp.concatenate([feat_prop, feats_keyframe[i]], -1),
                               P["forward_fusion.w"], P["forward_fusion.b"])
        feat_prop = conv_res_blocks(P, "forward_trunk",
                                    jnp.concatenate([x_i, out_l[i], feat_prop], -1), num_block)

        # NOTE: the reference computes a complex-domain attention branch here
        # (compress -> resblock1 -> conv3D -> cos/sin -> convreal/convimg) whose
        # result is immediately overwritten by the pixel-shuffle path below
        # ("out = self.lrelu(self.pixel_shuffle(self.upconv1(feat_prop)))"), so
        # it never reaches the module output.  It is skipped here (pure dead
        # compute); the returned tensor is identical to the reference.
        out = lrelu(pixel_shuffle(conv2d(feat_prop, P["upconv1.w"], P["upconv1.b"]), 2))
        out = lrelu(pixel_shuffle(conv2d(out, P["upconv2.w"], P["upconv2.b"]), 2))
        out = lrelu(conv2d(out, P["conv_hr.w"], P["conv_hr.b"]))
        out = conv2d(out, P["conv_last.w"], P["conv_last.b"])
        base = resize_bilinear(x_i, 4 * h, 4 * w, False)
        out_l[i] = out + base

    out = jnp.stack(out_l, axis=1)                                   # (b, n, 4h, 4w, 3)
    out = out[:, :, :4 * h_in, :4 * w_in, :]
    return jnp.transpose(out, (0, 1, 4, 2, 3))                       # back to NCHW


# --------------------------------------------------------------------------
# Deterministic parameter init (synthetic weights; no checkpoints)
# --------------------------------------------------------------------------
class _Init:
    def __init__(self, seed=0):
        self.key = jax.random.PRNGKey(seed)
        self.count = 0
        self.P = {}

    def _next_key(self):
        k = jax.random.fold_in(self.key, self.count)
        self.count += 1
        return k

    def conv(self, name, cout, cin, kh, kw, scale=1.0):
        fan_in = cin * kh * kw
        std = scale * 0.5 / math.sqrt(fan_in)
        self.P[name + ".w"] = jax.random.normal(
            self._next_key(), (cout, cin, kh, kw), jnp.float32) * std
        self.P[name + ".b"] = jnp.zeros((cout,), jnp.float32)


def init_params(num_feat=64, num_block=2, num_frame=5, dg=DEFORM_GROUPS, seed=0):
    I = _Init(seed)
    nf = num_feat
    # EDVR feature extractor
    I.conv("edvr.conv_first", nf, 3, 3, 3)
    for k in range(5):
        I.conv(f"edvr.fe{k}.conv1", nf, nf, 3, 3)
        I.conv(f"edvr.fe{k}.conv2", nf, nf, 3, 3)
    I.conv("edvr.conv_l2_1", nf, nf, 3, 3)
    I.conv("edvr.conv_l2_2", nf, nf, 3, 3)
    I.conv("edvr.conv_l3_1", nf, nf, 3, 3)
    I.conv("edvr.conv_l3_2", nf, nf, 3, 3)
    # PCD alignment
    for i in (3, 2, 1):
        L = f"l{i}"
        I.conv(f"pcd.offset_conv1.{L}", nf, nf * 2, 3, 3)
        if i == 3:
            I.conv(f"pcd.offset_conv2.{L}", nf, nf, 3, 3)
        else:
            I.conv(f"pcd.offset_conv2.{L}", nf, nf * 2, 3, 3)
            I.conv(f"pcd.offset_conv3.{L}", nf, nf, 3, 3)
        I.conv(f"pcd.dcn.{L}.conv_offset", dg * 3 * 9, nf, 3, 3, scale=0.05)
        I.conv(f"pcd.dcn.{L}", nf, nf, 3, 3)
        if i < 3:
            I.conv(f"pcd.feat_conv.{L}", nf, nf * 2, 3, 3)
    I.conv("pcd.cas_offset_conv1", nf, nf * 2, 3, 3)
    I.conv("pcd.cas_offset_conv2", nf, nf, 3, 3)
    I.conv("pcd.cas_dcn.conv_offset", dg * 3 * 9, nf, 3, 3, scale=0.05)
    I.conv("pcd.cas_dcn", nf, nf, 3, 3)
    # TSA fusion
    I.conv("tsa.temporal_attn1", nf, nf, 3, 3)
    I.conv("tsa.temporal_attn2", nf, nf, 3, 3)
    I.conv("tsa.feat_fusion", nf, num_frame * nf, 1, 1)
    I.conv("tsa.spatial_attn1", nf, num_frame * nf, 1, 1)
    I.conv("tsa.spatial_attn2", nf, nf * 2, 1, 1)
    I.conv("tsa.spatial_attn3", nf, nf, 3, 3)
    I.conv("tsa.spatial_attn4", nf, nf, 1, 1)
    I.conv("tsa.spatial_attn5", nf, nf, 3, 3)
    I.conv("tsa.spatial_attn_l1", nf, nf, 1, 1)
    I.conv("tsa.spatial_attn_l2", nf, nf * 2, 3, 3)
    I.conv("tsa.spatial_attn_l3", nf, nf, 3, 3)
    I.conv("tsa.spatial_attn_add1", nf, nf, 1, 1)
    I.conv("tsa.spatial_attn_add2", nf, nf, 1, 1)
    # SpyNet (6 basic modules of 5 x 7x7 convs)
    chans = [(8, 32), (32, 64), (64, 32), (32, 16), (16, 2)]
    for level in range(6):
        for j, (ci, co) in enumerate(chans):
            I.conv(f"spynet.bm{level}.c{j}", co, ci, 7, 7)
    # Main CIconVSR branches
    I.conv("backward_fusion", nf, 2 * nf, 3, 3)
    I.conv("backward_trunk.conv0", nf, nf + 3, 3, 3)
    for k in range(num_block):
        I.conv(f"backward_trunk.rb{k}.conv1", nf, nf, 3, 3)
        I.conv(f"backward_trunk.rb{k}.conv2", nf, nf, 3, 3)
    I.conv("forward_fusion", nf, 2 * nf, 3, 3)
    I.conv("forward_trunk.conv0", nf, 2 * nf + 3, 3, 3)
    for k in range(num_block):
        I.conv(f"forward_trunk.rb{k}.conv1", nf, nf, 3, 3)
        I.conv(f"forward_trunk.rb{k}.conv2", nf, nf, 3, 3)
    # NOTE: the reference's compress / resblock1 / conv3D / convreal / convimg
    # parameters feed only the dead complex-attention branch (its result is
    # overwritten before use), so they are omitted from the synthetic init.
    I.conv("upconv1", nf * 4, nf, 3, 3)
    I.conv("upconv2", 64 * 4, nf, 3, 3)
    I.conv("conv_hr", 64, 64, 3, 3)
    I.conv("conv_last", 3, 64, 3, 3)
    return I.P


# --------------------------------------------------------------------------
if __name__ == "__main__":
    b, n, c, h, w = 1, 5, 3, 16, 16      # small LR sequence (n >= 5 required by EDVR padding)
    key = jax.random.PRNGKey(0)
    x = jax.random.uniform(key, (b, n, c, h, w), jnp.float32)

    params = init_params(num_feat=64, num_block=2, num_frame=5, seed=0)

    out = ciconvsr_forward(params, x, num_feat=64, num_block=2,
                           keyframe_stride=5, temporal_padding=2)
    out = jax.block_until_ready(out)
    assert out.shape == (b, n, 3, 4 * h, 4 * w), out.shape
    assert bool(jnp.all(jnp.isfinite(out)))
    print("KERNEL_OK")
</pallas_src>

<mosaic_0001>
module attributes {stable_mosaic.version = 11 : i64} {
  func.func @_dconv_kernel(%arg0: i32, %arg1: i32, %arg2: i32, %arg3: memref<1x1x7x8xbf16, #tpu.memory_space<vmem>>, %arg4: memref<1x7x8x128xbf16, #tpu.memory_space<vmem>>, %arg5: memref<1x128xf32, #tpu.memory_space<vmem>>, %arg6: memref<1x1x1x128xf32, #tpu.memory_space<vmem>>, %arg7: memref<1x128xf32, #tpu.memory_space<vmem>>) attributes {dimension_semantics = [#tpu.dimension_semantics<parallel>, #tpu.dimension_semantics<parallel>, #tpu.dimension_semantics<arbitrary>], iteration_bounds = array<i64: 4, 1, 7>, scalar_prefetch = 0 : i64, scratch_operands = 1 : i64, tpu.core_type = #tpu.core_type<tc>, window_params = [{transform_indices = @transform_0, window_bounds = array<i64: 1, 1, 7, 8>}, {transform_indices = @transform_1, window_bounds = array<i64: 1, 7, 8, 128>}, {pipeline_mode = #tpu.pipeline_mode<synchronous>, transform_indices = @transform_2, window_bounds = array<i64: 1, 128>}, {transform_indices = @transform_3, window_bounds = array<i64: 1, 1, 1, 128>}]} {
    %c0_i32 = arith.constant 0 : i32
    %0 = arith.cmpi eq, %arg2, %c0_i32 : i32
    %1 = arith.extui %0 : i1 to i32
    %c0_i32_0 = arith.constant 0 : i32
    %2 = arith.cmpi ne, %1, %c0_i32_0 : i32
    scf.if %2 {
      %cst_37 = arith.constant 0.000000e+00 : f32
      %45 = vector.broadcast %cst_37 : f32 to vector<1x128xf32>
      %c0_38 = arith.constant 0 : index
      %c0_39 = arith.constant 0 : index
      %46 = vector.load %arg7[%c0_38, %c0_39] : memref<1x128xf32, #tpu.memory_space<vmem>>, vector<1x128xf32>
      tpu.vector_store %arg7[%c0_38, %c0_39], %45 {strides = array<i32>} : memref<1x128xf32, #tpu.memory_space<vmem>>, vector<1x128xf32>,
    } else {
    }
    %c0 = arith.constant 0 : index
    %c0_1 = arith.constant 0 : index
    %c0_2 = arith.constant 0 : index
    %c0_3 = arith.constant 0 : index
    %3 = vector.load %arg3[%c0, %c0_1, %c0_2, %c0_3] : memref<1x1x7x8xbf16, #tpu.memory_space<vmem>>, vector<1x1x7x8xbf16>
    %4 = vector.shape_cast %3 : vector<1x1x7x8xbf16> to vector<7x8xbf16>
    %c0_4 = arith.constant 0 : index
    %c0_5 = arith.constant 0 : index
    %5 = vector.load %arg7[%c0_4, %c0_5] : memref<1x128xf32, #tpu.memory_space<vmem>>, vector<1x128xf32>
    %6 = vector.extract_strided_slice %4 {offsets = [0, 0], sizes = [1, 8], strides = [1, 1]} : vector<7x8xbf16> to vector<1x8xbf16>
    %c0_6 = arith.constant 0 : index
    %c0_7 = arith.constant 0 : index
    %c0_8 = arith.constant 0 : index
    %c0_9 = arith.constant 0 : index
    %7 = vector.load %arg4[%c0_6, %c0_7, %c0_8, %c0_9] : memref<1x7x8x128xbf16, #tpu.memory_space<vmem>>, vector<1x1x8x128xbf16>
    %8 = vector.shape_cast %7 : vector<1x1x8x128xbf16> to vector<8x128xbf16>
    %cst = arith.constant dense<0.000000e+00> : vector<1x128xf32>
    %9 = tpu.matmul %6, %8, %cst {dimension_numbers = #tpu.dot_dimension_numbers<[1], [0], [0], [1], [0, 0, 1, 1], [], []>} : vector<1x8xbf16>, vector<8x128xbf16>, vector<1x128xf32> -> vector<1x128xf32>
    %10 = arith.addf %5, %9 : vector<1x128xf32>
    %11 = vector.extract_strided_slice %4 {offsets = [1, 0], sizes = [1, 8], strides = [1, 1]} : vector<7x8xbf16> to vector<1x8xbf16>
    %c0_10 = arith.constant 0 : index
    %c1 = arith.constant 1 : index
    %c0_11 = arith.constant 0 : index
    %c0_12 = arith.constant 0 : index
    %12 = vector.load %arg4[%c0_10, %c1, %c0_11, %c0_12] : memref<1x7x8x128xbf16, #tpu.memory_space<vmem>>, vector<1x1x8x128xbf16>
    %13 = vector.shape_cast %12 : vector<1x1x8x128xbf16> to vector<8x128xbf16>
    %cst_13 = arith.constant dense<0.000000e+00> : vector<1x128xf32>
    %14 = tpu.matmul %11, %13, %cst_13 {dimension_numbers = #tpu.dot_dimension_numbers<[1], [0], [0], [1], [0, 0, 1, 1], [], []>} : vector<1x8xbf16>, vector<8x128xbf16>, vector<1x128xf32> -> vector<1x128xf32>
    %15 = arith.addf %10, %14 : vector<1x128xf32>
    %16 = vector.extract_strided_slice %4 {offsets = [2, 0], sizes = [1, 8], strides = [1, 1]} : vector<7x8xbf16> to vector<1x8xbf16>
    %c0_14 = arith.constant 0 : index
    %c2 = arith.constant 2 : index
    %c0_15 = arith.constant 0 : index
    %c0_16 = arith.constant 0 : index
    %17 = vector.load %arg4[%c0_14, %c2, %c0_15, %c0_16] : memref<1x7x8x128xbf16, #tpu.memory_space<vmem>>, vector<1x1x8x128xbf16>
    %18 = vector.shape_cast %17 : vector<1x1x8x128xbf16> to vector<8x128xbf16>
    %cst_17 = arith.constant dense<0.000000e+00> : vector<1x128xf32>
    %19 = tpu.matmul %16, %18, %cst_17 {dimension_numbers = #tpu.dot_dimension_numbers<[1], [0], [0], [1], [0, 0, 1, 1], [], []>} : vector<1x8xbf16>, vector<8x128xbf16>, vector<1x128xf32> -> vector<1x128xf32>
    %20 = arith.addf %15, %19 : vector<1x128xf32>
    %21 = vector.extract_strided_slice %4 {offsets = [3, 0], sizes = [1, 8], strides = [1, 1]} : vector<7x8xbf16> to vector<1x8xbf16>
    %c0_18 = arith.constant 0 : index
    %c3 = arith.constant 3 : index
    %c0_19 = arith.constant 0 : index
    %c0_20 = arith.constant 0 : index
    %22 = vector.load %arg4[%c0_18, %c3, %c0_19, %c0_20] : memref<1x7x8x128xbf16, #tpu.memory_space<vmem>>, vector<1x1x8x128xbf16>
    %23 = vector.shape_cast %22 : vector<1x1x8x128xbf16> to vector<8x128xbf16>
    %cst_21 = arith.constant dense<0.000000e+00> : vector<1x128xf32>
    %24 = tpu.matmul %21, %23, %cst_21 {dimension_numbers = #tpu.dot_dimension_numbers<[1], [0], [0], [1], [0, 0, 1, 1], [], []>} : vector<1x8xbf16>, vector<8x128xbf16>, vector<1x128xf32> -> vector<1x128xf32>
    %25 = arith.addf %20, %24 : vector<1x128xf32>
    %26 = vector.extract_strided_slice %4 {offsets = [4, 0], sizes = [1, 8], strides = [1, 1]} : vector<7x8xbf16> to vector<1x8xbf16>
    %c0_22 = arith.constant 0 : index
    %c4 = arith.constant 4 : index
    %c0_23 = arith.constant 0 : index
    %c0_24 = arith.constant 0 : index
    %27 = vector.load %arg4[%c0_22, %c4, %c0_23, %c0_24] : memref<1x7x8x128xbf16, #tpu.memory_space<vmem>>, vector<1x1x8x128xbf16>
    %28 = vector.shape_cast %27 : vector<1x1x8x128xbf16> to vector<8x128xbf16>
    %cst_25 = arith.constant dense<0.000000e+00> : vector<1x128xf32>
    %29 = tpu.matmul %26, %28, %cst_25 {dimension_numbers = #tpu.dot_dimension_numbers<[1], [0], [0], [1], [0, 0, 1, 1], [], []>} : vector<1x8xbf16>, vector<8x128xbf16>, vector<1x128xf32> -> vector<1x128xf32>
    %30 = arith.addf %25, %29 : vector<1x128xf32>
    %31 = vector.extract_strided_slice %4 {offsets = [5, 0], sizes = [1, 8], strides = [1, 1]} : vector<7x8xbf16> to vector<1x8xbf16>
    %c0_26 = arith.constant 0 : index
    %c5 = arith.constant 5 : index
    %c0_27 = arith.constant 0 : index
    %c0_28 = arith.constant 0 : index
    %32 = vector.load %arg4[%c0_26, %c5, %c0_27, %c0_28] : memref<1x7x8x128xbf16, #tpu.memory_space<vmem>>, vector<1x1x8x128xbf16>
    %33 = vector.shape_cast %32 : vector<1x1x8x128xbf16> to vector<8x128xbf16>
    %cst_29 = arith.constant dense<0.000000e+00> : vector<1x128xf32>
    %34 = tpu.matmul %31, %33, %cst_29 {dimension_numbers = #tpu.dot_dimension_numbers<[1], [0], [0], [1], [0, 0, 1, 1], [], []>} : vector<1x8xbf16>, vector<8x128xbf16>, vector<1x128xf32> -> vector<1x128xf32>
    %35 = arith.addf %30, %34 : vector<1x128xf32>
    %36 = vector.extract_strided_slice %4 {offsets = [6, 0], sizes = [1, 8], strides = [1, 1]} : vector<7x8xbf16> to vector<1x8xbf16>
    %c0_30 = arith.constant 0 : index
    %c6 = arith.constant 6 : index
    %c0_31 = arith.constant 0 : index
    %c0_32 = arith.constant 0 : index
    %37 = vector.load %arg4[%c0_30, %c6, %c0_31, %c0_32] : memref<1x7x8x128xbf16, #tpu.memory_space<vmem>>, vector<1x1x8x128xbf16>
    %38 = vector.shape_cast %37 : vector<1x1x8x128xbf16> to vector<8x128xbf16>
    %cst_33 = arith.constant dense<0.000000e+00> : vector<1x128xf32>
    %39 = tpu.matmul %36, %38, %cst_33 {dimension_numbers = #tpu.dot_dimension_numbers<[1], [0], [0], [1], [0, 0, 1, 1], [], []>} : vector<1x8xbf16>, vector<8x128xbf16>, vector<1x128xf32> -> vector<1x128xf32>
    %40 = arith.addf %35, %39 : vector<1x128xf32>
    %c0_34 = arith.constant 0 : index
    %c0_35 = arith.constant 0 : index
    %41 = vector.load %arg7[%c0_34, %c0_35] : memref<1x128xf32, #tpu.memory_space<vmem>>, vector<1x128xf32>
    tpu.vector_store %arg7[%c0_34, %c0_35], %40 {strides = array<i32>} : memref<1x128xf32, #tpu.memory_space<vmem>>, vector<1x128xf32>,
    %c6_i32 = arith.constant 6 : i32
    %42 = arith.cmpi eq, %arg2, %c6_i32 : i32
    %43 = arith.extui %42 : i1 to i32
    %c0_i32_36 = arith.constant 0 : i32
    %44 = arith.cmpi ne, %43, %c0_i32_36 : i32
    scf.if %44 {
      %c0_37 = arith.constant 0 : index
      %c0_38 = arith.constant 0 : index
      %45 = vector.load %arg7[%c0_37, %c0_38] : memref<1x128xf32, #tpu.memory_space<vmem>>, vector<1x128xf32>
      %c0_39 = arith.constant 0 : index
      %c0_40 = arith.constant 0 : index
      %46 = vector.load %arg5[%c0_39, %c0_40] : memref<1x128xf32, #tpu.memory_space<vmem>>, vector<1x128xf32>
      %47 = arith.addf %45, %46 : vector<1x128xf32>
      %cst_41 = arith.constant 0.000000e+00 : f32
      %48 = vector.broadcast %cst_41 : f32 to vector<1x128xf32>
      %49 = arith.maximumf %47, %48 : vector<1x128xf32>
      %c0_42 = arith.constant 0 : index
      %c0_43 = arith.constant 0 : index
      %c0_44 = arith.constant 0 : index
      %c0_45 = arith.constant 0 : index
      %50 = vector.load %arg6[%c0_42, %c0_43, %c0_44, %c0_45] : memref<1x1x1x128xf32, #tpu.memory_space<vmem>>, vector<1x1x1x128xf32>
      %51 = vector.shape_cast %50 : vector<1x1x1x128xf32> to vector<1x128xf32>
      %52 = vector.shape_cast %49 : vector<1x128xf32> to vector<1x1x1x128xf32>
      tpu.vector_store %arg6[%c0_42, %c0_43, %c0_44, %c0_45], %52 {strides = array<i32>} : memref<1x1x1x128xf32, #tpu.memory_space<vmem>>, vector<1x1x1x128xf32>,
    } else {
    }
    return
  }
  func.func @transform_0(%arg0: i32, %arg1: i32, %arg2: i32) -> (i32, i32, i32, i32) {
    %0 = arith.addi %arg1, %arg2 : i32
    %c0_i32 = arith.constant 0 : i32
    %c0_i32_0 = arith.constant 0 : i32
    %c0_i32_1 = arith.constant 0 : i32
    return %arg0, %0, %c0_i32, %c0_i32_0 : i32, i32, i32, i32
  }
  func.func @transform_1(%arg0: i32, %arg1: i32, %arg2: i32) -> (i32, i32, i32, i32) {
    %c0_i32 = arith.constant 0 : i32
    %c0_i32_0 = arith.constant 0 : i32
    %c0_i32_1 = arith.constant 0 : i32
    %c0_i32_2 = arith.constant 0 : i32
    return %arg2, %c0_i32, %c0_i32_0, %c0_i32_1 : i32, i32, i32, i32
  }
  func.func @transform_2(%arg0: i32, %arg1: i32, %arg2: i32) -> (i32, i32) {
    %c0_i32 = arith.constant 0 : i32
    %c0_i32_0 = arith.constant 0 : i32
    %c0_i32_1 = arith.constant 0 : i32
    return %c0_i32, %c0_i32_0 : i32, i32
  }
  func.func @transform_3(%arg0: i32, %arg1: i32, %arg2: i32) -> (i32, i32, i32, i32) {
    %c0_i32 = arith.constant 0 : i32
    %c0_i32_0 = arith.constant 0 : i32
    %c0_i32_1 = arith.constant 0 : i32
    return %arg0, %arg1, %c0_i32, %c0_i32_0 : i32, i32, i32, i32
  }
}

</mosaic_0001>

<llo_original>
// kernel: tpu_custom_call.1
$region0: #{tpu_custom_call.1}
  #allocation0 [shape = 'u32[]', space=smem, size = 0x4, offset = 0x4, fixed_abs, tag = 'smem constant byte address 0x4 - core index']
  #allocation1 [shape = 'u32[144,128]{1,0:T(1,128)}', space=vmem, size = 0x12000, scoped, tag = 'internal scratch']
  #allocation2 [shape = 'f32[1,128]{1,0:T(1,128)}', space=vmem, size = 0x200, scoped, tag = 'scratch operand']
  %s0 = inlined_call_operand.vmem [shape: bf16[4,7,7,8], index: 0, kind: input, shape index: {}]
  %s1 = inlined_call_operand.vmem [shape: bf16[7,7,8,128], index: 1, kind: input, shape index: {}]
  %s2 = inlined_call_operand.vmem [shape: f32[1,128], index: 2, kind: input, shape index: {}]
  %s3 = inlined_call_operand.hbm [shape: f32[4,1,1,128], index: 3, kind: output, shape index: {}]
  %s4 = sld [smem:[#allocation0]]
  $region53: #{tpu_custom_call.1} parent=0
    _
  %s6 = ssub.s32 1, %s4
  %s7 = scalar_select 0, %s6, %s4
  $region1: #{tpu_custom_call.1} parent=0
    #allocation3 [shape = 'u8[1024]{0}', space=vmem, size = 0x400, scoped, tag = 'output window, operand 0']
    #allocation4 [shape = 's32[2]{0}', space=sflag, size = 0x8, scoped, tag = 'scoped memory for tpu_custom_call.1']
    %8 = vsyncpa [#allocation4], 0
    %s9 = scalar_lea.sflag [#allocation4], 1
    %10 = vsyncpa %s9, 0
    loop: start=0, step=1, limit=30
    $region2: #{tpu_custom_call.1} parent=1 // loop_pre_header
      _
    $region3: #{tpu_custom_call.1} parent=1 // loop_header
      %s12 = sphi 0, %s16
      %p13 = scmp.ge.s32.totalorder %s12, 30
      %s19 = sphi 0, %s38
      %s20 = sphi 0, %s34
      %s21 = sphi 0, %s30
      %s22 = sphi 0, %s19
      %s23 = sphi 0, %s20
      %s24 = sphi 0, %s21
      %s25 = sphi 0, %s22
      %s26 = sphi 0, %s23
      %s27 = sphi 0, %s24
      %s45 = sphi 0, %s47
      %s48 = sphi 0, %s45
      %s49 = sphi 0, %s48
      %s65 = sphi 0, %s49
      %s71 = sphi 0, %s73
      %s74 = sphi 0, %s71
      %s75 = sphi 0, %s74
      %s91 = sphi 0, %s75
      %s95 = sphi 0, %s95
      %s97 = sphi 0, %s95
      %s98 = sphi 0, %s97
      %s112 = sphi 0, %s98
      %s120 = sphi 0, %s122
      %s123 = sphi 0, %s120
      %s124 = sphi 0, %s123
      %s140 = sphi 0, %s124
    $region4: #{tpu_custom_call.1} parent=1 // loop_header_branch
      %15 = sbr.rel (%p13) target = $region8
    $region5: #{tpu_custom_call.1} parent=1 // loop_body
      %s17 = ssub.s32 %s12, 1
      %s18 = ssub.s32 %s12, 2
      %s28 = sadd.s32 1, %s21
      %p29 = scmp.ge.s32.totalorder %s28, 7
      %s30 = scalar_select %p29, 0, %s28
      %s31 = sadd.s32 1, %s20
      %s32 = scalar_select %p29, %s31, %s20
      %p33 = scmp.ge.s32.totalorder %s32, 1
      %s34 = scalar_select %p33, 0, %s32
      %s35 = sadd.s32 1, %s19
      %s36 = scalar_select %p33, %s35, %s19
      %p37 = scmp.ge.s32.totalorder %s36, 4
      %s38 = scalar_select %p37, 0, %s36
      %s39 = sadd.s32 %s20, %s21
      %s40 = sadd.s32 %s34, %s30
      %s41 = ssub.s32 %s19, %s38
      %s42 = ssub.s32 %s39, %s40
      %s43 = sor.u32 %s41, %s42
      %p44 = scmp.eq.s32.totalorder %s43, 0
      %s46 = sadd.s32 %s45, 1
      %s47 = scalar_select %p44, %s45, %s46
      %p50 = pneg %p44
      %p51 = scmp.eq.s32.totalorder %s12, 27
      %p52 = por %p50, %p51
      %p53 = scmp.ne.s32.totalorder %s45, %s48
      %p54 = scmp.eq.s32.totalorder %s12, 0
      %p55 = por %p53, %p54
      %p56 = scmp.ne.s32.totalorder %s45, %s48
      %p57 = scmp.eq.s32.totalorder %s17, 27
      %p58 = por %p56, %p57
      %p59 = scmp.ne.s32.totalorder %s48, %s49
      %p60 = scmp.eq.s32.totalorder %s17, 0
      %p61 = por %p59, %p60
      %p62 = scmp.ne.s32.totalorder %s48, %s49
      %p63 = scmp.eq.s32.totalorder %s18, 27
      %p64 = por %p62, %p63
      %p66 = scmp.ne.s32.totalorder %s49, %s65
      %p67 = scmp.eq.s32.totalorder %s18, 0
      %p68 = por %p66, %p67
      %s69 = ssub.s32 %s21, %s30
      %p70 = scmp.eq.s32.totalorder %s69, 0
      %s72 = sadd.s32 %s71, 1
      %s73 = scalar_select %p70, %s71, %s72
      %p76 = pneg %p70
      %p77 = scmp.eq.s32.totalorder %s12, 27
      %p78 = por %p76, %p77
      %p79 = scmp.ne.s32.totalorder %s71, %s74
      %p80 = scmp.eq.s32.totalorder %s12, 0
      %p81 = por %p79, %p80
      %p82 = scmp.ne.s32.totalorder %s71, %s74
      %p83 = scmp.eq.s32.totalorder %s17, 27
      %p84 = por %p82, %p83
      %p85 = scmp.ne.s32.totalorder %s74, %s75
      %p86 = scmp.eq.s32.totalorder %s17, 0
      %p87 = por %p85, %p86
      %p88 = scmp.ne.s32.totalorder %s74, %s75
      %p89 = scmp.eq.s32.totalorder %s18, 27
      %p90 = por %p88, %p89
      %p92 = scmp.ne.s32.totalorder %s75, %s91
      %p93 = scmp.eq.s32.totalorder %s18, 0
      %p94 = por %p92, %p93
      %s96 = sadd.s32 %s95, 1
      %p99 = scmp.eq.s32.totalorder %s12, 27
      %p100 = scmp.ne.s32.totalorder %s95, %s97
      %p101 = scmp.eq.s32.totalorder %s12, 0
      %p102 = por %p100, %p101
      %p103 = scmp.ne.s32.totalorder %s95, %s97
      %p104 = scmp.eq.s32.totalorder %s17, 27
      %p105 = por %p103, %p104
      %p106 = scmp.ne.s32.totalorder %s97, %s98
      %p107 = scmp.eq.s32.totalorder %s17, 0
      %p108 = por %p106, %p107
      %p109 = scmp.ne.s32.totalorder %s97, %s98
      %p110 = scmp.eq.s32.totalorder %s18, 27
      %p111 = por %p109, %p110
      %p113 = scmp.ne.s32.totalorder %s98, %s112
      %p114 = scmp.eq.s32.totalorder %s18, 0
      %p115 = por %p113, %p114
      %s116 = ssub.s32 %s19, %s38
      %s117 = ssub.s32 %s20, %s34
      %s118 = sor.u32 %s116, %s117
      %p119 = scmp.eq.s32.totalorder %s118, 0
      %s121 = sadd.s32 %s120, 1
      %s122 = scalar_select %p119, %s120, %s121
      %p125 = pneg %p119
      %p126 = scmp.eq.s32.totalorder %s12, 27
      %p127 = por %p125, %p126
      %p128 = scmp.ne.s32.totalorder %s120, %s123
      %p129 = scmp.eq.s32.totalorder %s12, 0
      %p130 = por %p128, %p129
      %p131 = scmp.ne.s32.totalorder %s120, %s123
      %p132 = scmp.eq.s32.totalorder %s17, 27
      %p133 = por %p131, %p132
      %p134 = scmp.ne.s32.totalorder %s123, %s124
      %p135 = scmp.eq.s32.totalorder %s17, 0
      %p136 = por %p134, %p135
      %p137 = scmp.ne.s32.totalorder %s123, %s124
      %p138 = scmp.eq.s32.totalorder %s18, 27
      %p139 = por %p137, %p138
      %p141 = scmp.ne.s32.totalorder %s124, %s140
      %p142 = scmp.eq.s32.totalorder %s18, 0
      %p143 = por %p141, %p142
      %p144 = scmp.le.s32.totalorder 1, %s12
      %p145 = scmp.lt.s32.totalorder %s12, 29
      %p146 = pnand %p144, %p145
      %p147 = pneg %p146
      // Predicated region
      $region9: #{tpu_custom_call.1} parent=5 // pred_check
        _
      $region10: #{tpu_custom_call.1} parent=5 // pred_check_branch
        %149 = sbr.rel (%p146) target = $region12
      $region11: #{tpu_custom_call.1} parent=5 // pred_region
        %s150 = ssub.s32 %s12, 1
        // Predicated region
        $region13: #{tpu_custom_call.1} parent=11 // pred_check
          %p151 = pneg %p108
        $region14: #{tpu_custom_call.1} parent=11 // pred_check_branch
          %153 = sbr.rel (%p151) target = $region16
        $region15: #{tpu_custom_call.1} parent=11 // pred_region
          _
        $region16: #{tpu_custom_call.1} parent=11 // pred_fallthru
          _
      $region12: #{tpu_custom_call.1} parent=5 // pred_fallthru
        _
      %p154 = scmp.lt.s32.totalorder %s12, 28
      // Predicated region
      $region17: #{tpu_custom_call.1} parent=5 // pred_check
        %p155 = pneg %p154
      $region18: #{tpu_custom_call.1} parent=5 // pred_check_branch
        %157 = sbr.rel (%p155) target = $region20
      $region19: #{tpu_custom_call.1} parent=5 // pred_region
        // Predicated region
        $region21: #{tpu_custom_call.1} parent=19 // pred_check
          %p158 = pneg %p55
        $region22: #{tpu_custom_call.1} parent=19 // pred_check_branch
          %160 = sbr.rel (%p158) target = $region24
        $region23: #{tpu_custom_call.1} parent=19 // pred_region
          %s161 = sadd.s32 %s20, %s21
          %p162 = scmp.lt.s32.totalorder %s19, 3
          %s163 = scalar_select %p162, %s19, 3
          %p164 = scmp.lt.s32.totalorder %s161, 6
          %s165 = scalar_select %p164, %s161, 6
          %s166 = smul.addr %s163, 7
          %s167 = sadd.s32 %s165, %s166
          %s168 = smul.addr %s167, 4
          %s169 = scalar_lea.vmem %s0, %s168
          %s170 = sadd.s32 %s20, %s21
        $region24: #{tpu_custom_call.1} parent=19 // pred_fallthru
          _
        // Predicated region
        $region25: #{tpu_custom_call.1} parent=19 // pred_check
          %p171 = pneg %p81
        $region26: #{tpu_custom_call.1} parent=19 // pred_check_branch
          %173 = sbr.rel (%p171) target = $region28
        $region27: #{tpu_custom_call.1} parent=19 // pred_region
          %p174 = scmp.lt.s32.totalorder %s21, 6
          %s175 = scalar_select %p174, %s21, 6
          %s176 = smul.addr %s175, 7
          %s177 = smul.addr %s176, 4
          %s178 = scalar_lea.vmem %s1, %s177
        $region28: #{tpu_custom_call.1} parent=19 // pred_fallthru
          _
      $region20: #{tpu_custom_call.1} parent=5 // pred_fallthru
        _
      %p179 = scmp.le.s32.totalorder 1, %s12
      %p180 = scmp.lt.s32.totalorder %s12, 29
      %p181 = pnand %p179, %p180
      %p182 = pneg %p181
      // Predicated region
      $region29: #{tpu_custom_call.1} parent=5 // pred_check
        _
      $region30: #{tpu_custom_call.1} parent=5 // pred_check_branch
        %184 = sbr.rel (%p181) target = $region32
      $region31: #{tpu_custom_call.1} parent=5 // pred_region
        %s185 = ssub.s32 %s12, 1
        %s186 = sadd.s32 %s23, %s24
        %p187 = scmp.lt.s32.totalorder %s22, 3
        %s188 = scalar_select %p187, %s22, 3
        %p189 = scmp.lt.s32.totalorder %s186, 6
        %s190 = scalar_select %p189, %s186, 6
        %s191 = smul.addr %s188, 7
        %s192 = sadd.s32 %s190, %s191
        %s193 = smul.addr %s192, 4
        %s194 = scalar_lea.vmem %s0, %s193
        %p195 = pneg %p61
        %p196 = pneg %p58
        %p197 = scmp.lt.s32.totalorder %s24, 6
        %s198 = scalar_select %p197, %s24, 6
        %s199 = smul.addr %s198, 7
        %s200 = smul.addr %s199, 4
        %s201 = scalar_lea.vmem %s1, %s200
        %p202 = pneg %p87
        %p203 = pneg %p84
        %p204 = pneg %p108
        %p205 = pneg %p105
        %p206 = pneg %p136
        %p207 = pneg %p133
        %s208 = sand.u32 %s123, 1
        %s209 = scalar_lea.sflag [#allocation4], %s208
        %s210 = sand.u32 %s123, 1
        %s211 = scalar_lea.vmem [#allocation3], %s210
        %s212 = sadd.s32 %s23, %s24
        %p213 = scmp.lt.s32.totalorder %s22, 3
        %s214 = scalar_select %p213, %s22, 3
        %p215 = scmp.lt.s32.totalorder %s212, 6
        %s216 = scalar_select %p215, %s212, 6
        %s217 = smul.addr %s214, 7
        %s218 = sadd.s32 %s216, %s217
        %s219 = smul.addr %s218, 4
        %s220 = scalar_lea.vmem %s0, %s219
        %s221 = sadd.s32 %s23, %s24
        %p222 = scmp.lt.s32.totalorder %s24, 6
        %s223 = scalar_select %p222, %s24, 6
        %s224 = smul.addr %s223, 7
        %s225 = smul.addr %s224, 4
        %s226 = scalar_lea.vmem %s1, %s225
        %p228 = scmp.eq.s32.totalorder %s24, 0
        // Predicated region
        $region33: #{tpu_custom_call.1} parent=31 // pred_check
          %p229 = pneg %p228
        $region34: #{tpu_custom_call.1} parent=31 // pred_check_branch
          %231 = sbr.rel (%p229) target = $region36
        $region35: #{tpu_custom_call.1} parent=31 // pred_region
          %232 = vst [vmem:[#allocation2] sm:$0x1] 0.0
        $region36: #{tpu_custom_call.1} parent=31 // pred_fallthru
          _
        %v233 = vld [vmem:[%s220] sm:$0xf]
        %v234 = vld [vmem:[#allocation2] sm:$0x1]
        %v235 = vld [vmem:[%s226] sm:$0xf]
        %vm236 = vcmask 64512
        %v238 = vsel %vm236, %v233, 0
        %vm240 = vcmask 1043456
        %v242 = vsel %vm240, %v235, 0
        %244 = vmatprep.subr.bf16.mxu0 0
        %245 = vmatpush1.bf16.msra.mxu0 %v242
        %246 = vmatprep.subr.bf16.mxu0 0
        %247 = vmatpush1.bf16.msra.mxu0 0
        %248 = vmatprep.subr.bf16.mxu0 0
        %249 = vmatpush1.bf16.msra.mxu0 0
        %250 = vmatprep.subr.bf16.mxu0 0
        %251 = vmatpush1.bf16.msra.mxu0 0
        %252 = vmatprep.subr.bf16.mxu0 0
        %253 = vmatpush1.bf16.msra.mxu0 0
        %254 = vmatprep.subr.bf16.mxu0 0
        %255 = vmatpush1.bf16.msra.mxu0 0
        %256 = vmatprep.subr.bf16.mxu0 0
        %257 = vmatpush1.bf16.msra.mxu0 0
        %258 = vmatprep.subr.bf16.mxu0 0
        %259 = vmatpush1.bf16.msra.mxu0 0
        %260 = vmatprep.subr.bf16.mxu0 0
        %261 = vmatpush1.bf16.msra.mxu0 0
        %262 = vmatprep.subr.bf16.mxu0 0
        %263 = vmatpush1.bf16.msra.mxu0 0
        %264 = vmatprep.subr.bf16.mxu0 0
        %265 = vmatpush1.bf16.msra.mxu0 0
        %266 = vmatprep.subr.bf16.mxu0 0
        %267 = vmatpush1.bf16.msra.mxu0 0
        %268 = vmatprep.subr.bf16.mxu0 0
        %269 = vmatpush1.bf16.msra.mxu0 0
        %270 = vmatprep.subr.bf16.mxu0 0
        %271 = vmatpush1.bf16.msra.mxu0 0
        %272 = vmatprep.subr.bf16.mxu0 0
        %273 = vmatpush1.bf16.msra.mxu0 0
        %274 = vmatprep.subr.bf16.mxu0 0
        %275 = vmatpush1.bf16.msra.mxu0 0
        %276 = vmatprep.mubr.bf16.mxu0 0
        %277 = vmatmul.mubr.bf16.gmra.mrb[0].mxu0 %v238
        %v278 = vpop.f32.mrb[0].mxu0
        %v279 = vadd.f32 0.0, %v278
        %v280 = vpop.f32.mrb[0].mxu0
        %v281 = vpop.f32.mrb[0].mxu0
        %v282 = vpop.f32.mrb[0].mxu0
        %283 = vdwg.mxu0
        %v284 = vadd.f32 %v234, %v279
        %s285 = scalar_lea.vmem %s226, 4
        %v286 = vld [vmem:[%s285] sm:$0xf]
        %v288 = vunpack.c.l.b16 %v233
        %v289 = vpack.c.b16 %v288, %v288
        %v291 = vshrl.u32 %v289, 16
        %v294 = vsel %vm236, %v291, 0
        %v297 = vsel %vm240, %v286, 0
        %299 = vmatprep.subr.bf16.mxu0 0
        %300 = vmatpush1.bf16.msra.mxu0 %v297
        %301 = vmatprep.subr.bf16.mxu0 0
        %302 = vmatpush1.bf16.msra.mxu0 0
        %303 = vmatprep.subr.bf16.mxu0 0
        %304 = vmatpush1.bf16.msra.mxu0 0
        %305 = vmatprep.subr.bf16.mxu0 0
        %306 = vmatpush1.bf16.msra.mxu0 0
        %307 = vmatprep.subr.bf16.mxu0 0
        %308 = vmatpush1.bf16.msra.mxu0 0
        %309 = vmatprep.subr.bf16.mxu0 0
        %310 = vmatpush1.bf16.msra.mxu0 0
        %311 = vmatprep.subr.bf16.mxu0 0
        %312 = vmatpush1.bf16.msra.mxu0 0
        %313 = vmatprep.subr.bf16.mxu0 0
        %314 = vmatpush1.bf16.msra.mxu0 0
        %315 = vmatprep.subr.bf16.mxu0 0
        %316 = vmatpush1.bf16.msra.mxu0 0
        %317 = vmatprep.subr.bf16.mxu0 0
        %318 = vmatpush1.bf16.msra.mxu0 0
        %319 = vmatprep.subr.bf16.mxu0 0
        %320 = vmatpush1.bf16.msra.mxu0 0
        %321 = vmatprep.subr.bf16.mxu0 0
        %322 = vmatpush1.bf16.msra.mxu0 0
        %323 = vmatprep.subr.bf16.mxu0 0
        %324 = vmatpush1.bf16.msra.mxu0 0
        %325 = vmatprep.subr.bf16.mxu0 0
        %326 = vmatpush1.bf16.msra.mxu0 0
        %327 = vmatprep.subr.bf16.mxu0 0
        %328 = vmatpush1.bf16.msra.mxu0 0
        %329 = vmatprep.subr.bf16.mxu0 0
        %330 = vmatpush1.bf16.msra.mxu0 0
        %331 = vmatprep.mubr.bf16.mxu0 0
        %332 = vmatmul.mubr.bf16.gmra.mrb[0].mxu0 %v294
        %v333 = vpop.f32.mrb[0].mxu0
        %v334 = vadd.f32 0.0, %v333
        %v335 = vpop.f32.mrb[0].mxu0
        %v336 = vpop.f32.mrb[0].mxu0
        %v337 = vpop.f32.mrb[0].mxu0
        %338 = vdwg.mxu0
        %v339 = vadd.f32 %v284, %v334
        %s340 = scalar_lea.vmem %s226, 8
        %v341 = vld [vmem:[%s340] sm:$0xf]
        %v342 = vrot.slane %v289, 1
        %v344 = vsel %vm236, %v342, 0
        %v347 = vsel %vm240, %v341, 0
        %349 = vmatprep.subr.bf16.mxu0 0
        %350 = vmatpush1.bf16.msra.mxu0 %v347
        %351 = vmatprep.subr.bf16.mxu0 0
        %352 = vmatpush1.bf16.msra.mxu0 0
        %353 = vmatprep.subr.bf16.mxu0 0
        %354 = vmatpush1.bf16.msra.mxu0 0
        %355 = vmatprep.subr.bf16.mxu0 0
        %356 = vmatpush1.bf16.msra.mxu0 0
        %357 = vmatprep.subr.bf16.mxu0 0
        %358 = vmatpush1.bf16.msra.mxu0 0
        %359 = vmatprep.subr.bf16.mxu0 0
        %360 = vmatpush1.bf16.msra.mxu0 0
        %361 = vmatprep.subr.bf16.mxu0 0
        %362 = vmatpush1.bf16.msra.mxu0 0
        %363 = vmatprep.subr.bf16.mxu0 0
        %364 = vmatpush1.bf16.msra.mxu0 0
        %365 = vmatprep.subr.bf16.mxu0 0
        %366 = vmatpush1.bf16.msra.mxu0 0
        %367 = vmatprep.subr.bf16.mxu0 0
        %368 = vmatpush1.bf16.msra.mxu0 0
        %369 = vmatprep.subr.bf16.mxu0 0
        %370 = vmatpush1.bf16.msra.mxu0 0
        %371 = vmatprep.subr.bf16.mxu0 0
        %372 = vmatpush1.bf16.msra.mxu0 0
        %373 = vmatprep.subr.bf16.mxu0 0
        %374 = vmatpush1.bf16.msra.mxu0 0
        %375 = vmatprep.subr.bf16.mxu0 0
        %376 = vmatpush1.bf16.msra.mxu0 0
        %377 = vmatprep.subr.bf16.mxu0 0
        %378 = vmatpush1.bf16.msra.mxu0 0
        %379 = vmatprep.subr.bf16.mxu0 0
        %380 = vmatpush1.bf16.msra.mxu0 0
        %381 = vmatprep.mubr.bf16.mxu0 0
        %382 = vmatmul.mubr.bf16.gmra.mrb[0].mxu0 %v344
        %v383 = vpop.f32.mrb[0].mxu0
        %v384 = vadd.f32 0.0, %v383
        %v385 = vpop.f32.mrb[0].mxu0
        %v386 = vpop.f32.mrb[0].mxu0
        %v387 = vpop.f32.mrb[0].mxu0
        %388 = vdwg.mxu0
        %v389 = vadd.f32 %v339, %v384
        %s390 = scalar_lea.vmem %s226, 12
        %v391 = vld [vmem:[%s390] sm:$0xf]
        %v392 = vrot.slane %v291, 1
        %v394 = vsel %vm236, %v392, 0
        %v397 = vsel %vm240, %v391, 0
        %399 = vmatprep.subr.bf16.mxu0 0
        %400 = vmatpush1.bf16.msra.mxu0 %v397
        %401 = vmatprep.subr.bf16.mxu0 0
        %402 = vmatpush1.bf16.msra.mxu0 0
        %403 = vmatprep.subr.bf16.mxu0 0
        %404 = vmatpush1.bf16.msra.mxu0 0
        %405 = vmatprep.subr.bf16.mxu0 0
        %406 = vmatpush1.bf16.msra.mxu0 0
        %407 = vmatprep.subr.bf16.mxu0 0
        %408 = vmatpush1.bf16.msra.mxu0 0
        %409 = vmatprep.subr.bf16.mxu0 0
        %410 = vmatpush1.bf16.msra.mxu0 0
        %411 = vmatprep.subr.bf16.mxu0 0
        %412 = vmatpush1.bf16.msra.mxu0 0
        %413 = vmatprep.subr.bf16.mxu0 0
        %414 = vmatpush1.bf16.msra.mxu0 0
        %415 = vmatprep.subr.bf16.mxu0 0
        %416 = vmatpush1.bf16.msra.mxu0 0
        %417 = vmatprep.subr.bf16.mxu0 0
        %418 = vmatpush1.bf16.msra.mxu0 0
        %419 = vmatprep.subr.bf16.mxu0 0
        %420 = vmatpush1.bf16.msra.mxu0 0
        %421 = vmatprep.subr.bf16.mxu0 0
        %422 = vmatpush1.bf16.msra.mxu0 0
        %423 = vmatprep.subr.bf16.mxu0 0
        %424 = vmatpush1.bf16.msra.mxu0 0
        %425 = vmatprep.subr.bf16.mxu0 0
        %426 = vmatpush1.bf16.msra.mxu0 0
        %427 = vmatprep.subr.bf16.mxu0 0
        %428 = vmatpush1.bf16.msra.mxu0 0
        %429 = vmatprep.subr.bf16.mxu0 0
        %430 = vmatpush1.bf16.msra.mxu0 0
        %431 = vmatprep.mubr.bf16.mxu0 0
        %432 = vmatmul.mubr.bf16.gmra.mrb[0].mxu0 %v394
        %v433 = vpop.f32.mrb[0].mxu0
        %v434 = vadd.f32 0.0, %v433
        %v435 = vpop.f32.mrb[0].mxu0
        %v436 = vpop.f32.mrb[0].mxu0
        %v437 = vpop.f32.mrb[0].mxu0
        %438 = vdwg.mxu0
        %v439 = vadd.f32 %v389, %v434
        %s440 = scalar_lea.vmem %s226, 16
        %v441 = vld [vmem:[%s440] sm:$0xf]
        %v442 = vrot.slane %v289, 2
        %v444 = vsel %vm236, %v442, 0
        %v447 = vsel %vm240, %v441, 0
        %449 = vmatprep.subr.bf16.mxu0 0
        %450 = vmatpush1.bf16.msra.mxu0 %v447
        %451 = vmatprep.subr.bf16.mxu0 0
        %452 = vmatpush1.bf16.msra.mxu0 0
        %453 = vmatprep.subr.bf16.mxu0 0
        %454 = vmatpush1.bf16.msra.mxu0 0
        %455 = vmatprep.subr.bf16.mxu0 0
        %456 = vmatpush1.bf16.msra.mxu0 0
        %457 = vmatprep.subr.bf16.mxu0 0
        %458 = vmatpush1.bf16.msra.mxu0 0
        %459 = vmatprep.subr.bf16.mxu0 0
        %460 = vmatpush1.bf16.msra.mxu0 0
        %461 = vmatprep.subr.bf16.mxu0 0
        %462 = vmatpush1.bf16.msra.mxu0 0
        %463 = vmatprep.subr.bf16.mxu0 0
        %464 = vmatpush1.bf16.msra.mxu0 0
        %465 = vmatprep.subr.bf16.mxu0 0
        %466 = vmatpush1.bf16.msra.mxu0 0
        %467 = vmatprep.subr.bf16.mxu0 0
        %468 = vmatpush1.bf16.msra.mxu0 0
        %469 = vmatprep.subr.bf16.mxu0 0
        %470 = vmatpush1.bf16.msra.mxu0 0
        %471 = vmatprep.subr.bf16.mxu0 0
        %472 = vmatpush1.bf16.msra.mxu0 0
        %473 = vmatprep.subr.bf16.mxu0 0
        %474 = vmatpush1.bf16.msra.mxu0 0
        %475 = vmatprep.subr.bf16.mxu0 0
        %476 = vmatpush1.bf16.msra.mxu0 0
        %477 = vmatprep.subr.bf16.mxu0 0
        %478 = vmatpush1.bf16.msra.mxu0 0
        %479 = vmatprep.subr.bf16.mxu0 0
        %480 = vmatpush1.bf16.msra.mxu0 0
        %481 = vmatprep.mubr.bf16.mxu0 0
        %482 = vmatmul.mubr.bf16.gmra.mrb[0].mxu0 %v444
        %v483 = vpop.f32.mrb[0].mxu0
        %v484 = vadd.f32 0.0, %v483
        %v485 = vpop.f32.mrb[0].mxu0
        %v486 = vpop.f32.mrb[0].mxu0
        %v487 = vpop.f32.mrb[0].mxu0
        %488 = vdwg.mxu0
        %v489 = vadd.f32 %v439, %v484
        %s490 = scalar_lea.vmem %s226, 20
        %v491 = vld [vmem:[%s490] sm:$0xf]
        %v492 = vrot.slane %v291, 2
        %v494 = vsel %vm236, %v492, 0
        %v497 = vsel %vm240, %v491, 0
        %499 = vmatprep.subr.bf16.mxu0 0
        %500 = vmatpush1.bf16.msra.mxu0 %v497
        %501 = vmatprep.subr.bf16.mxu0 0
        %502 = vmatpush1.bf16.msra.mxu0 0
        %503 = vmatprep.subr.bf16.mxu0 0
        %504 = vmatpush1.bf16.msra.mxu0 0
        %505 = vmatprep.subr.bf16.mxu0 0
        %506 = vmatpush1.bf16.msra.mxu0 0
        %507 = vmatprep.subr.bf16.mxu0 0
        %508 = vmatpush1.bf16.msra.mxu0 0
        %509 = vmatprep.subr.bf16.mxu0 0
        %510 = vmatpush1.bf16.msra.mxu0 0
        %511 = vmatprep.subr.bf16.mxu0 0
        %512 = vmatpush1.bf16.msra.mxu0 0
        %513 = vmatprep.subr.bf16.mxu0 0
        %514 = vmatpush1.bf16.msra.mxu0 0
        %515 = vmatprep.subr.bf16.mxu0 0
        %516 = vmatpush1.bf16.msra.mxu0 0
        %517 = vmatprep.subr.bf16.mxu0 0
        %518 = vmatpush1.bf16.msra.mxu0 0
        %519 = vmatprep.subr.bf16.mxu0 0
        %520 = vmatpush1.bf16.msra.mxu0 0
        %521 = vmatprep.subr.bf16.mxu0 0
        %522 = vmatpush1.bf16.msra.mxu0 0
        %523 = vmatprep.subr.bf16.mxu0 0
        %524 = vmatpush1.bf16.msra.mxu0 0
        %525 = vmatprep.subr.bf16.mxu0 0
        %526 = vmatpush1.bf16.msra.mxu0 0
        %527 = vmatprep.subr.bf16.mxu0 0
        %528 = vmatpush1.bf16.msra.mxu0 0
        %529 = vmatprep.subr.bf16.mxu0 0
        %530 = vmatpush1.bf16.msra.mxu0 0
        %531 = vmatprep.mubr.bf16.mxu0 0
        %532 = vmatmul.mubr.bf16.gmra.mrb[0].mxu0 %v494
        %v533 = vpop.f32.mrb[0].mxu0
        %v534 = vadd.f32 0.0, %v533
        %v535 = vpop.f32.mrb[0].mxu0
        %v536 = vpop.f32.mrb[0].mxu0
        %v537 = vpop.f32.mrb[0].mxu0
        %538 = vdwg.mxu0
        %v539 = vadd.f32 %v489, %v534
        %s540 = scalar_lea.vmem %s226, 24
        %v541 = vld [vmem:[%s540] sm:$0xf]
        %v542 = vrot.slane %v289, 3
        %v544 = vsel %vm236, %v542, 0
        %v547 = vsel %vm240, %v541, 0
        %549 = vmatprep.subr.bf16.mxu0 0
        %550 = vmatpush1.bf16.msra.mxu0 %v547
        %551 = vmatprep.subr.bf16.mxu0 0
        %552 = vmatpush1.bf16.msra.mxu0 0
        %553 = vmatprep.subr.bf16.mxu0 0
        %554 = vmatpush1.bf16.msra.mxu0 0
        %555 = vmatprep.subr.bf16.mxu0 0
        %556 = vmatpush1.bf16.msra.mxu0 0
        %557 = vmatprep.subr.bf16.mxu0 0
        %558 = vmatpush1.bf16.msra.mxu0 0
        %559 = vmatprep.subr.bf16.mxu0 0
        %560 = vmatpush1.bf16.msra.mxu0 0
        %561 = vmatprep.subr.bf16.mxu0 0
        %562 = vmatpush1.bf16.msra.mxu0 0
        %563 = vmatprep.subr.bf16.mxu0 0
        %564 = vmatpush1.bf16.msra.mxu0 0
        %565 = vmatprep.subr.bf16.mxu0 0
        %566 = vmatpush1.bf16.msra.mxu0 0
        %567 = vmatprep.subr.bf16.mxu0 0
        %568 = vmatpush1.bf16.msra.mxu0 0
        %569 = vmatprep.subr.bf16.mxu0 0
        %570 = vmatpush1.bf16.msra.mxu0 0
        %571 = vmatprep.subr.bf16.mxu0 0
        %572 = vmatpush1.bf16.msra.mxu0 0
        %573 = vmatprep.subr.bf16.mxu0 0
        %574 = vmatpush1.bf16.msra.mxu0 0
        %575 = vmatprep.subr.bf16.mxu0 0
        %576 = vmatpush1.bf16.msra.mxu0 0
        %577 = vmatprep.subr.bf16.mxu0 0
        %578 = vmatpush1.bf16.msra.mxu0 0
        %579 = vmatprep.subr.bf16.mxu0 0
        %580 = vmatpush1.bf16.msra.mxu0 0
        %581 = vmatprep.mubr.bf16.mxu0 0
        %582 = vmatmul.mubr.bf16.gmra.mrb[0].mxu0 %v544
        %v583 = vpop.f32.mrb[0].mxu0
        %v584 = vadd.f32 0.0, %v583
        %v585 = vpop.f32.mrb[0].mxu0
        %v586 = vpop.f32.mrb[0].mxu0
        %v587 = vpop.f32.mrb[0].mxu0
        %588 = vdwg.mxu0
        %v589 = vadd.f32 %v539, %v584
        %590 = vst [vmem:[#allocation2] sm:$0x1] %v589
        %p591 = scmp.eq.s32.totalorder %s24, 6
        // Predicated region
        $region37: #{tpu_custom_call.1} parent=31 // pred_check
          %p592 = pneg %p591
        $region38: #{tpu_custom_call.1} parent=31 // pred_check_branch
          %594 = sbr.rel (%p592) target = $region40
        $region39: #{tpu_custom_call.1} parent=31 // pred_region
          %v595 = vld [vmem:[#allocation2] sm:$0x1]
          %v596 = vld [vmem:[%s2] sm:$0x1]
          %v597 = vadd.f32 %v595, %v596
          %v598 = vmax.f32 %v597, 0.0
          %599 = vst [vmem:[%s211] sm:$0x1] %v598
        $region40: #{tpu_custom_call.1} parent=31 // pred_fallthru
          _
        %s600 = sand.u32 %s123, 1
        %s601 = scalar_lea.sflag [#allocation4], %s600
        %s602 = sand.u32 %s123, 1
        %s603 = scalar_lea.vmem [#allocation3], %s602
        // Predicated region
        $region41: #{tpu_custom_call.1} parent=31 // pred_check
          %p604 = pneg %p133
        $region42: #{tpu_custom_call.1} parent=31 // pred_check_branch
          %606 = sbr.rel (%p604) target = $region44
        $region43: #{tpu_custom_call.1} parent=31 // pred_region
          %s608 = ssub.s32 16, 16
          %609 = vsyncadd %s601, %s608
          %s610 = sadd.s32 %s23, %s22
          %s611 = smul.addr %s610, 16
          %s612 = scalar_lea.hbm %s3, %s611
          %s614 = sshll.u32 %s603, 4
          %s615 = int_to_ptr.vmem [resolvable:$true] %s614
          %617 = dma.vmem_to_hbm [thread:$0]  %s615, 16, %s612, %s601
        $region44: #{tpu_custom_call.1} parent=31 // pred_fallthru
          _
      $region32: #{tpu_custom_call.1} parent=5 // pred_fallthru
        _
      %p618 = scmp.le.s32.totalorder 2, %s12
      // Predicated region
      $region45: #{tpu_custom_call.1} parent=5 // pred_check
        %p619 = pneg %p618
      $region46: #{tpu_custom_call.1} parent=5 // pred_check_branch
        %621 = sbr.rel (%p619) target = $region48
      $region47: #{tpu_custom_call.1} parent=5 // pred_region
        %s622 = ssub.s32 %s12, 2
        // Predicated region
        $region49: #{tpu_custom_call.1} parent=47 // pred_check
          %p623 = pneg %p139
        $region50: #{tpu_custom_call.1} parent=47 // pred_check_branch
          %625 = sbr.rel (%p623) target = $region52
        $region51: #{tpu_custom_call.1} parent=47 // pred_region
          %s626 = sand.u32 %s124, 1
          %s627 = scalar_lea.sflag [#allocation4], %s626
          %s628 = sand.u32 %s124, 1
          %s629 = scalar_lea.vmem [#allocation3], %s628
          %630 = dma.done %s627, 16
        $region52: #{tpu_custom_call.1} parent=47 // pred_fallthru
          _
      $region48: #{tpu_custom_call.1} parent=5 // pred_fallthru
        _
    $region6: #{tpu_custom_call.1} parent=1 // loop_footer
      %s16 = sadd.s32 1, %s12
    $region7: #{tpu_custom_call.1} parent=1 // loop_footer_branch
      %11 = sbr.rel target = $region3
    $region8: #{tpu_custom_call.1} parent=1 // loop_exit
      _
    %631 = vsyncpa [#allocation4], 1
    %s632 = scalar_lea.sflag [#allocation4], 1
    %633 = vsyncpa %s632, 1

</llo_original>
